<compile_context>
chip_gen: v5e
topology: v5e:2x2
jax: 0.10.0
libtpu: 0.0.40
codegen_flags: <defaults>
</compile_context>

<pallas_src>
import math

import jax
import jax.numpy as jnp
from jax.experimental import pallas as pl
from jax.experimental.pallas import tpu as pltpu


def _sinpos_kernel(t_ref, tab_ref, o_ref):
    # t_ref:   (TILE_B, 1) f32 positions
    # tab_ref: (2, D)      f32 VMEM-resident table:
    #            row 0 = 10000**(-2*(col//2)/D)   (reciprocal denominator)
    #            row 1 = (col & 1) * pi/2         (phase: 0 even cols, pi/2 odd cols)
    # o_ref:   (TILE_B, D) f32 embeddings
    pos = t_ref[...]                 # (TILE_B, 1)
    inv_denom = tab_ref[0:1, :]      # (1, D)
    phase = tab_ref[1:2, :]          # (1, D)
    # cos(x) == sin(x + pi/2): one sin per element on the EUP.
    o_ref[...] = jnp.sin(pos * inv_denom + phase)


def sinusoidal_position_embedding(time_steps, embedding_dim, *, tile_b=512):
    """time_steps: (B,) int or float array. Returns (B, embedding_dim) float32,
    matching the PyTorch SinusodialPositionEmbedding forward (embedding_dim even)."""
    assert embedding_dim % 2 == 0, "embedding_dim must be even"
    B = time_steps.shape[0]
    D = embedding_dim

    # --- host-side precompute of the per-column table (hoisted out of the kernel) ---
    col = jnp.arange(D, dtype=jnp.int32)
    pair = (col >> 1).astype(jnp.float32)                              # i = col // 2
    inv_denom = jnp.exp(-(2.0 * pair / float(D)) * jnp.log(10000.0))   # 10000**(-2i/D)
    phase = (col & 1).astype(jnp.float32) * (math.pi / 2.0)            # 0 even, pi/2 odd
    table = jnp.stack([inv_denom, phase], axis=0)                      # (2, D) f32

    # --- tile over the batch dimension; pad B to a tile multiple, slice back after ---
    tb = min(tile_b, max(8, ((B + 7) // 8) * 8))
    B_pad = ((B + tb - 1) // tb) * tb
    t2d = time_steps.astype(jnp.float32).reshape(B, 1)
    if B_pad != B:
        t2d = jnp.pad(t2d, ((0, B_pad - B), (0, 0)))

    out = pl.pallas_call(
        _sinpos_kernel,
        out_shape=jax.ShapeDtypeStruct((B_pad, D), jnp.float32),
        grid_spec=pltpu.PrefetchScalarGridSpec(
            num_scalar_prefetch=0,
            grid=(B_pad // tb,),
            in_specs=[
                pl.BlockSpec((tb, 1), lambda i: (i, 0)),   # positions, tiled over B
                pl.BlockSpec((2, D), lambda i: (0, 0)),    # resident freq/phase table
            ],
            out_specs=pl.BlockSpec((tb, D), lambda i: (i, 0)),
        ),
        compiler_params=pltpu.CompilerParams(
            dimension_semantics=("parallel",),
        ),
        cost_estimate=pl.CostEstimate(
            flops=2 * B_pad * D,
            transcendentals=B_pad * D,
            bytes_accessed=(B_pad * 1 + 2 * D + B_pad * D) * 4,
        ),
    )(t2d, table)
    return out[:B]


def _reference(time_steps, embedding_dim):
    # pure-JAX reference matching the PyTorch forward exactly
    B = time_steps.shape[0]
    pos = time_steps.astype(jnp.float32)[:, None]
    half = embedding_dim // 2
    denom = 10000.0 ** (2.0 * jnp.arange(half, dtype=jnp.float32) / embedding_dim)
    emb = jnp.zeros((B, embedding_dim), jnp.float32)
    emb = emb.at[:, 0::2].set(jnp.sin(pos / denom))
    emb = emb.at[:, 1::2].set(jnp.cos(pos / denom))
    return emb


if __name__ == "__main__":
    key = jax.random.PRNGKey(0)
    B, D = 8, 128  # lane-dense output (D multiple of 128), typical diffusion embed dim
    # deterministic diffusion-style step indices
    time_steps = jax.random.randint(key, (B,), 0, 1000).astype(jnp.float32)

    out = sinusoidal_position_embedding(time_steps, D)
    out = jax.block_until_ready(out)

    ref = _reference(time_steps, D)
    assert out.shape == (B, D)
    # Tolerance accounts for the f32 reformulation (sin(x + pi/2) for cos, and
    # multiply-by-reciprocal instead of divide) at arguments up to ~1000.
    assert jnp.allclose(out, ref, atol=1e-3, rtol=1e-3), "mismatch vs reference"
    print("KERNEL_OK")
</pallas_src>

<mosaic_0001>
module attributes {stable_mosaic.version = 11 : i64} {
  func.func @_sinpos_kernel(%arg0: i32, %arg1: memref<8x1xf32, #tpu.memory_space<vmem>>, %arg2: memref<2x128xf32, #tpu.memory_space<vmem>>, %arg3: memref<8x128xf32, #tpu.memory_space<vmem>>) attributes {dimension_semantics = [#tpu.dimension_semantics<parallel>], iteration_bounds = array<i64: 1>, scalar_prefetch = 0 : i64, scratch_operands = 0 : i64, tpu.core_type = #tpu.core_type<tc>, window_params = [{transform_indices = @transform_0, window_bounds = array<i64: 8, 1>}, {pipeline_mode = #tpu.pipeline_mode<synchronous>, transform_indices = @transform_1, window_bounds = array<i64: 2, 128>}, {transform_indices = @transform_2, window_bounds = array<i64: 8, 128>}]} {
    %c0 = arith.constant 0 : index
    %c0_0 = arith.constant 0 : index
    %0 = vector.load %arg1[%c0, %c0_0] : memref<8x1xf32, #tpu.memory_space<vmem>>, vector<8x1xf32>
    %c0_1 = arith.constant 0 : index
    %c0_2 = arith.constant 0 : index
    %1 = vector.load %arg2[%c0_1, %c0_2] : memref<2x128xf32, #tpu.memory_space<vmem>>, vector<1x128xf32>
    %c1 = arith.constant 1 : index
    %c0_3 = arith.constant 0 : index
    %2 = vector.load %arg2[%c1, %c0_3] : memref<2x128xf32, #tpu.memory_space<vmem>>, vector<1x128xf32>
    %3 = vector.broadcast %0 : vector<8x1xf32> to vector<8x128xf32>
    %4 = vector.broadcast %1 : vector<1x128xf32> to vector<8x128xf32>
    %5 = arith.mulf %3, %4 : vector<8x128xf32>
    %6 = vector.broadcast %2 : vector<1x128xf32> to vector<8x128xf32>
    %7 = arith.addf %5, %6 : vector<8x128xf32>
    %8 = math.sin %7 : vector<8x128xf32>
    %c0_4 = arith.constant 0 : index
    %c0_5 = arith.constant 0 : index
    %9 = vector.load %arg3[%c0_4, %c0_5] : memref<8x128xf32, #tpu.memory_space<vmem>>, vector<8x128xf32>
    tpu.vector_store %arg3[%c0_4, %c0_5], %8 {strides = array<i32>} : memref<8x128xf32, #tpu.memory_space<vmem>>, vector<8x128xf32>,
    return
  }
  func.func @transform_0(%arg0: i32) -> (i32, i32) {
    %c0_i32 = arith.constant 0 : i32
    %c0_i32_0 = arith.constant 0 : i32
    return %arg0, %c0_i32 : i32, i32
  }
  func.func @transform_1(%arg0: i32) -> (i32, i32) {
    %c0_i32 = arith.constant 0 : i32
    %c0_i32_0 = arith.constant 0 : i32
    %c0_i32_1 = arith.constant 0 : i32
    return %c0_i32, %c0_i32_0 : i32, i32
  }
  func.func @transform_2(%arg0: i32) -> (i32, i32) {
    %c0_i32 = arith.constant 0 : i32
    %c0_i32_0 = arith.constant 0 : i32
    return %arg0, %c0_i32 : i32, i32
  }
}

</mosaic_0001>

<llo_original>
// kernel: tpu_custom_call.1
$region0: #{tpu_custom_call.1}
  #allocation0 [shape = 'u32[]', space=smem, size = 0x4, offset = 0x4, fixed_abs, tag = 'smem constant byte address 0x4 - core index']
  #allocation1 [shape = 'u32[72,128]{1,0:T(1,128)}', space=vmem, size = 0x9000, scoped, tag = 'internal scratch']
  %s0 = inlined_call_operand.vmem [shape: f32[8,1], index: 0, kind: input, shape index: {}]
  %s1 = inlined_call_operand.vmem [shape: f32[2,128], index: 1, kind: input, shape index: {}]
  %s2 = inlined_call_operand.hbm [shape: f32[8,128], index: 2, kind: output, shape index: {}]
  %s3 = sld [smem:[#allocation0]]
  $region18: #{tpu_custom_call.1} parent=0
    _
  %s5 = ssub.s32 1, %s3
  %s6 = scalar_select 0, %s5, %s3
  $region1: #{tpu_custom_call.1} parent=0
    #allocation2 [shape = 'u8[4096]{0}', space=vmem, size = 0x1000, scoped, tag = 'output window, operand 0, single buffered']
    #allocation3 [shape = 's32[1]{0}', space=sflag, size = 0x4, scoped, tag = 'scoped memory for tpu_custom_call.1']
    %7 = vsyncpa [#allocation3], 0
    // Predicated region
    $region2: #{tpu_custom_call.1} parent=1 // pred_check
      _
    $region3: #{tpu_custom_call.1} parent=1 // pred_check_branch
      %9 = sbr.rel (0) target = $region5
    $region4: #{tpu_custom_call.1} parent=1 // pred_region
      _
    $region5: #{tpu_custom_call.1} parent=1 // pred_fallthru
      _
    // Predicated region
    $region6: #{tpu_custom_call.1} parent=1 // pred_check
      _
    $region7: #{tpu_custom_call.1} parent=1 // pred_check_branch
      %11 = sbr.rel (0) target = $region9
    $region8: #{tpu_custom_call.1} parent=1 // pred_region
      _
    $region9: #{tpu_custom_call.1} parent=1 // pred_fallthru
      _
    %v12 = vld [vmem:[%s0] sm:$0xff]
    %v13 = vld [vmem:[%s1] sm:$0x1]
    %v14 = vld [vmem:[%s1 + $0x1] sm:$0x1]
    %16 = vset.pattern.permute.xlu0 0
    %17 = vperm.xlu0 %16, %v12
    %v18 = vpop.permute.xlu0 %17
    %v20 = vperm.slane %v13, 0
    %v21 = vmul.f32 %v18, %v20
    %v22 = vperm.slane %v14, 0
    %v23 = vadd.f32 %v21, %v22
    %v24 = vand.u32 2147483647, %v23
    %vm25 = vcmp.le.f32.partialorder %v24, 0.7853982
    %vm26 = vcmp.lt.s32.totalorder %v23, 0
    %v27 = vand.u32 %v23, 2139095040
    %v28 = vshrl.u32 %v27, 23
    %v29 = vsub.s32 %v28, 127
    %v30 = vand.u32 2147483647, %v23
    %v31 = vand.u32 %v30, 8388607
    %v32 = vor.u32 %v31, 8388608
    %v33 = vsub.s32 0, %v32
    %v34 = vadd.s32 %v29, 1
    %vm35 = vcmp.gt.s32.totalorder %v34, 0
    %v36 = vsel %vm35, %v34, 0
    %v37 = vshrl.u32 %v36, 5
    %v38 = vand.u32 %v36, 31
    %v39 = vsub.s32 32, %v38
    %v40 = vshrl.u32 683565275, %v39
    %v41 = vshll.u32 683565275, %v38
    %v42 = vshrl.u32 2475754826, %v39
    %v43 = vor.u32 %v41, %v42
    %v44 = vshll.u32 2475754826, %v38
    %v45 = vshrl.u32 2131351028, %v39
    %v46 = vor.u32 %v44, %v45
    %v47 = vshll.u32 2131351028, %v38
    %v48 = vshrl.u32 2102212464, %v39
    %v49 = vor.u32 %v47, %v48
    %v50 = vshll.u32 2102212464, %v38
    %v51 = vshrl.u32 920167782, %v39
    %v52 = vor.u32 %v50, %v51
    %v53 = vshll.u32 920167782, %v38
    %v54 = vshrl.u32 1326507024, %v39
    %v55 = vor.u32 %v53, %v54
    %vm56 = vcmp.lt.s32.totalorder %v37, 1
    %vm57 = vcmp.lt.s32.totalorder %v37, 2
    %vm58 = vcmp.lt.s32.totalorder %v37, 3
    %vm59 = vcmp.lt.s32.totalorder %v37, 4
    %v60 = vsel %vm56, %v40, %v43
    %v61 = vsel %vm59, %v49, 2102212464
    %v62 = vsel %vm58, %v46, %v61
    %v63 = vsel %vm57, %v60, %v62
    %v64 = vsel %vm56, %v43, %v46
    %v65 = vsel %vm59, %v52, 920167782
    %v66 = vsel %vm58, %v49, %v65
    %v67 = vsel %vm57, %v64, %v66
    %v68 = vsel %vm56, %v46, %v49
    %v69 = vsel %vm59, %v55, 1326507024
    %v70 = vsel %vm58, %v52, %v69
    %v71 = vsel %vm57, %v68, %v70
    %v72 = vshll.u32 %v32, 8
    %v73 = vand.u32 %v72, 65535
    %v74 = vshrl.u32 %v72, 16
    %v75 = vand.u32 %v71, 65535
    %v76 = vshrl.u32 %v71, 16
    %v77 = vmul.u32 %v73, %v75
    %v78 = vmul.u32 %v73, %v76
    %v79 = vmul.u32 %v74, %v75
    %v80 = vmul.u32 %v74, %v76
    %v81 = vshll.u32 %v78, 16
    %v82 = vshrl.u32 %v78, 16
    %v83 = vshll.u32 %v79, 16
    %v84 = vshrl.u32 %v79, 16
    %vm85 = vc.u32 %v77, %v81
    %v86 = vsel %vm85, 1, 0
    %v87 = vadd.s32 %v77, %v81
    %v88 = vadd.s32 %v80, %v86
    %vm89 = vc.u32 %v87, %v83
    %v90 = vsel %vm89, 1, 0
    %v91 = vadd.s32 %v87, %v83
    %v92 = vadd.s32 %v88, %v90
    %v93 = vadd.s32 %v92, %v82
    %v94 = vadd.s32 %v93, %v84
    %v95 = vand.u32 %v72, 65535
    %v96 = vshrl.u32 %v72, 16
    %v97 = vand.u32 %v67, 65535
    %v98 = vshrl.u32 %v67, 16
    %v99 = vmul.u32 %v95, %v97
    %v100 = vmul.u32 %v95, %v98
    %v101 = vmul.u32 %v96, %v97
    %v102 = vmul.u32 %v96, %v98
    %v103 = vshll.u32 %v100, 16
    %v104 = vshrl.u32 %v100, 16
    %v105 = vshll.u32 %v101, 16
    %v106 = vshrl.u32 %v101, 16
    %vm107 = vc.u32 %v99, %v103
    %v108 = vsel %vm107, 1, 0
    %v109 = vadd.s32 %v99, %v103
    %v110 = vadd.s32 %v102, %v108
    %vm111 = vc.u32 %v109, %v105
    %v112 = vsel %vm111, 1, 0
    %v113 = vadd.s32 %v109, %v105
    %v114 = vadd.s32 %v110, %v112
    %v115 = vadd.s32 %v114, %v104
    %v116 = vadd.s32 %v115, %v106
    %v117 = vmul.u32 %v72, %v63
    %v118 = vadd.s32 %v94, %v113
    %vm119 = vc.u32 %v94, %v113
    %v120 = vadd.s32 %v116, 1
    %v121 = vsel %vm119, %v120, %v116
    %v122 = vadd.s32 %v117, %v121
    %v123 = vadd.s32 %v122, 536870912
    %v124 = vshrl.u32 %v123, 30
    %v125 = vshll.u32 %v124, 30
    %v126 = vsub.s32 %v122, %v125
    %vm127 = vcmp.lt.s32.totalorder %v126, 0
    %v128 = vsub.s32 0, %v126
    %v129 = vsel %vm127, %v128, %v126
    %v130 = vclz %v129
    %v131 = vsub.s32 %v130, 2
    %vm132 = vcmp.gt.s32.totalorder 0, %v131
    %v133 = vsel %vm132, 0, %v131
    %v134 = vsub.s32 32, %v133
    %v135 = vshll.u32 %v126, %v133
    %v136 = vshrl.u32 %v118, %v134
    %v137 = vor.u32 %v135, %v136
    %v138 = vsub.s32 4294967266, %v133
    %v139 = vadd.s32 %v138, 127
    %v140 = vshll.u32 %v139, 23
    %v141 = vor.u32 4788187, %v140
    %v142 = vand.u32 2147483647, %v141
    %v144 = vcvt.s32.f32 %v137
    %v145 = vmul.f32 %v144, %v142
    %v146 = vxor.u32 %v145, 2147483648
    %v147 = vsel %vm26, %v146, %v145
    %v148 = vsub.s32 4, %v124
    %v149 = vsel %vm26, %v148, %v124
    %v150 = vsel %vm25, %v23, %v147
    %v151 = vsel %vm25, 0, %v149
    %v152 = vmul.f32 %v150, %v150
    %v153 = vmul.f32 %v152, -0.001358992
    %v154 = vadd.f32 %v153, 0.041655596
    %v155 = vmul.f32 %v152, %v154
    %v156 = vadd.f32 %v155, -0.4999988
    %v157 = vmul.f32 %v152, %v156
    %v158 = vadd.f32 1.0, %v157
    %v159 = vmul.f32 %v150, %v150
    %v160 = vmul.f32 %v159, -0.00019511016
    %v161 = vadd.f32 %v160, 0.008332121
    %v162 = vmul.f32 %v159, %v161
    %v163 = vadd.f32 %v162, -0.16666654
    %v164 = vmul.f32 %v159, %v163
    %v165 = vadd.f32 %v164, 1.0
    %v166 = vmul.f32 %v165, %v150
    %vm167 = vweird.f32 %v23
    %v168 = vadd.s32 %v151, 3
    %v169 = vand.u32 %v168, 3
    %vm170 = vcmp.lt.s32.totalorder %v169, 2
    %vm171 = vcmp.eq.s32.totalorder %v169, 0
    %v172 = vxor.u32 %v166, 2147483648
    %v173 = vsel %vm171, %v158, %v172
    %vm174 = vcmp.eq.s32.totalorder %v169, 2
    %v175 = vxor.u32 %v158, 2147483648
    %v176 = vsel %vm174, %v175, %v166
    %v177 = vsel %vm170, %v173, %v176
    %v178 = vsel %vm167, nan, %v177
    %179 = vst [vmem:[#allocation2] sm:$0xff] %v178
    // Predicated region
    $region10: #{tpu_custom_call.1} parent=1 // pred_check
      _
    $region11: #{tpu_custom_call.1} parent=1 // pred_check_branch
      %181 = sbr.rel (0) target = $region13
    $region12: #{tpu_custom_call.1} parent=1 // pred_region
      %183 = vsyncadd [#allocation3], 0
      %s185 = sshll.u32 [#allocation2], 4
      %s186 = int_to_ptr.vmem [resolvable:$true] %s185
      %s187 = sshll.u32 %s2, 4
      %s188 = int_to_ptr.hbm [resolvable:$true] %s187
      %190 = dma.vmem_to_hbm [thread:$0]  %s186, 128, %s188, [#allocation3]
    $region13: #{tpu_custom_call.1} parent=1 // pred_fallthru
      _
    // Predicated region
    $region14: #{tpu_custom_call.1} parent=1 // pred_check
      _
    $region15: #{tpu_custom_call.1} parent=1 // pred_check_branch
      %192 = sbr.rel (0) target = $region17
    $region16: #{tpu_custom_call.1} parent=1 // pred_region
      %194 = dma.done [#allocation3], 128
    $region17: #{tpu_custom_call.1} parent=1 // pred_fallthru
      _
    %195 = vsyncpa [#allocation3], 1

</llo_original>
